<compile_context>
chip_gen: v5e
topology: v5e:2x2
jax: 0.10.0
libtpu: 0.0.40
codegen_flags: <defaults>
</compile_context>

<pallas_src>
import functools

import jax
import jax.numpy as jnp
from jax.experimental import pallas as pl
from jax.experimental.pallas import tpu as pltpu


def _convT_phase_kernel(xt_ref, xb_ref, w_ref, b_ref, o_ref):
    # xt_ref / xb_ref : (1, 1, Cin, L+1)  "top" (xp[a]) / "bottom" (xp[a+1]) padded input
    #                   rows for this tile, flattened (row, col) in the lane dim,
    #                   +1 slack lane so the column-shifted view stays in-block.
    # w_ref           : (4, 4*Cout, Cin)  phase-stacked taps per shift group
    #                   groups: 0 = xp[a, b], 1 = xp[a, b+1], 2 = xp[a+1, b], 3 = xp[a+1, b+1]
    # b_ref           : (4*Cout, 1)       bias tiled over the 4 phases
    # o_ref           : (1, 1, 4*Cout, L) phase-major output slab (lane-dense store)
    xt = xt_ref[0, 0]                       # (Cin, L+1)
    xb = xb_ref[0, 0]
    xt0, xt1 = xt[:, :-1], xt[:, 1:]        # shift-by-one column in lanes
    xb0, xb1 = xb[:, :-1], xb[:, 1:]

    # Four (4*Cout, Cin) @ (Cin, L) MXU matmuls, accumulated in the output VMEM ref
    # (ref accumulation -> MRB-friendly on v7x, avoids extra VPU add passes).
    o_ref[0, 0, :, :] = (
        jnp.dot(w_ref[0], xt0, preferred_element_type=jnp.float32) + b_ref[...]
    )
    o_ref[0, 0, :, :] += jnp.dot(w_ref[1], xt1, preferred_element_type=jnp.float32)
    o_ref[0, 0, :, :] += jnp.dot(w_ref[2], xb0, preferred_element_type=jnp.float32)
    o_ref[0, 0, :, :] += jnp.dot(w_ref[3], xb1, preferred_element_type=jnp.float32)


def _auto_ta(A, Wp2, Cin, Cout, vmem_budget_bytes=6 * 2**20):
    """Pick the output-row-pair tile so that double-buffered blocks (2 input slabs of
    Cin x ta*Wp2 plus 1 output slab of 4*Cout x ta*Wp2, f32) stay within a conservative
    budget that fits every generation's scoped VMEM (v5e 16 MiB, v6e/v7x 32 MiB)."""
    bytes_per_row = 4 * Wp2 * (2 * Cin + 4 * Cout) * 2
    ta = max(1, vmem_budget_bytes // max(bytes_per_row, 1))
    return int(min(A, ta))


def transition_up(x_nchw, weight, bias, *, ta=None):
    """ConvTranspose2d(in_ch, out_ch, kernel_size=3, stride=2, padding=0, bias=True).

    x_nchw : (N, Cin, H, W)    weight : (Cin, Cout, 3, 3)    bias : (Cout,)
    returns (N, Cout, 2H+1, 2W+1) float32 (PyTorch semantics).
    """
    N, Cin, H, W = x_nchw.shape
    Cout = weight.shape[1]
    Hout, Wout = 2 * H + 1, 2 * W + 1
    A = H + 1                      # number of output row-pairs (a -> rows 2a, 2a+1)
    Wp2 = W + 2                    # padded row width (one zero column each side)

    if ta is None:
        ta = _auto_ta(A, Wp2, Cin, Cout)
    ta = max(1, min(int(ta), A))
    n_t = -(-A // ta)              # cdiv
    A_pad = n_t * ta
    L = ta * Wp2                   # flattened (row, col) lanes per tile
    f32 = jnp.float32

    x = x_nchw.astype(f32)
    w = weight.astype(f32)

    # ---- input prep (NCHW kept; only a 1-pixel zero border + per-tile regrouping) ----
    # xrows[n, ci, i, :] = zero-padded row i-1 of x (i == 0 and i >= H+1 are zero pads).
    xrows = jnp.zeros((N, Cin, A_pad + 1, Wp2), f32)
    xrows = xrows.at[:, :, 1:H + 1, 1:W + 1].set(x)

    def tiles(row0):
        r = xrows[:, :, row0:row0 + A_pad, :]            # (N, Cin, A_pad, Wp2)
        r = r.reshape(N, Cin, n_t, L)
        r = jnp.transpose(r, (0, 2, 1, 3))               # (N, n_t, Cin, L)
        return jnp.pad(r, ((0, 0), (0, 0), (0, 0), (0, 1)))   # +1 slack lane (zeros)

    xtop = tiles(0)    # xp[a]   rows per tile
    xbot = tiles(1)    # xp[a+1] rows per tile (the 1-row halo, read as a 2nd operand)

    # ---- weights: phase-stacked LHS, one (4*Cout, Cin) block per shift group ----
    # out row index = (2*pr + pc)*Cout + co, with phase (pr, pc) = (oy%2, ox%2).
    def tap(kh, kw):                                     # (Cout, Cin)
        return jnp.transpose(w[:, :, kh, kw], (1, 0))

    wmat = jnp.zeros((4, 4 * Cout, Cin), f32)
    # group 0: xp[a, b]
    wmat = wmat.at[0, 0 * Cout:1 * Cout, :].set(tap(2, 2))
    # group 1: xp[a, b+1]
    wmat = wmat.at[1, 0 * Cout:1 * Cout, :].set(tap(2, 0))
    wmat = wmat.at[1, 1 * Cout:2 * Cout, :].set(tap(2, 1))
    # group 2: xp[a+1, b]
    wmat = wmat.at[2, 0 * Cout:1 * Cout, :].set(tap(0, 2))
    wmat = wmat.at[2, 2 * Cout:3 * Cout, :].set(tap(1, 2))
    # group 3: xp[a+1, b+1]
    wmat = wmat.at[3, 0 * Cout:1 * Cout, :].set(tap(0, 0))
    wmat = wmat.at[3, 1 * Cout:2 * Cout, :].set(tap(0, 1))
    wmat = wmat.at[3, 2 * Cout:3 * Cout, :].set(tap(1, 0))
    wmat = wmat.at[3, 3 * Cout:4 * Cout, :].set(tap(1, 1))

    bias4 = jnp.tile(bias.astype(f32), 4).reshape(4 * Cout, 1)

    out_raw = pl.pallas_call(
        _convT_phase_kernel,
        out_shape=jax.ShapeDtypeStruct((N, n_t, 4 * Cout, L), f32),
        grid_spec=pltpu.PrefetchScalarGridSpec(
            num_scalar_prefetch=0,
            grid=(N, n_t),
            in_specs=[
                pl.BlockSpec((1, 1, Cin, L + 1), lambda n, t: (n, t, 0, 0)),
                pl.BlockSpec((1, 1, Cin, L + 1), lambda n, t: (n, t, 0, 0)),
                pl.BlockSpec((4, 4 * Cout, Cin), lambda n, t: (0, 0, 0)),
                pl.BlockSpec((4 * Cout, 1), lambda n, t: (0, 0)),
            ],
            out_specs=pl.BlockSpec((1, 1, 4 * Cout, L), lambda n, t: (n, t, 0, 0)),
        ),
        compiler_params=pltpu.CompilerParams(
            dimension_semantics=("parallel", "parallel"),
            vmem_limit_bytes=32 * 1024 * 1024,
        ),
    )(xtop, xbot, wmat, bias4)

    # ---- un-phase + crop + NCHW (single transpose/reshape, needed for NCHW anyway) ----
    o = out_raw.reshape(N, n_t, 2, 2, Cout, ta, Wp2)      # (n, t, pr, pc, co, r, col)
    o = jnp.transpose(o, (0, 4, 1, 5, 2, 6, 3))           # (n, co, t, r, pr, col, pc)
    o = o.reshape(N, Cout, 2 * A_pad, 2 * Wp2)
    return o[:, :, :Hout, :Wout]


def ref_transition_up(x_nchw, weight, bias):
    """Pure-JAX reference, straight from the ConvTranspose2d definition."""
    N, Cin, H, W = x_nchw.shape
    Cout = weight.shape[1]
    Hout, Wout = 2 * H + 1, 2 * W + 1
    x = jnp.transpose(x_nchw, (0, 2, 3, 1)).astype(jnp.float32)
    out = jnp.zeros((N, Hout, Wout, Cout), jnp.float32)
    for kh in range(3):
        for kw in range(3):
            contrib = jnp.einsum("nhwc,cd->nhwd", x, weight[:, :, kh, kw])
            out = out.at[:, kh:kh + 2 * H - 1:2, kw:kw + 2 * W - 1:2, :].add(contrib)
    out = out + bias[None, None, None, :]
    return jnp.transpose(out, (0, 3, 1, 2))


if __name__ == "__main__":
    # Small, module-consistent shapes: batch=2, in_channels=4, out_channels=8, 16x16.
    N, Cin, Cout, H, W = 2, 4, 8, 16, 16

    key = jax.random.PRNGKey(0)
    kx, kw, kb = jax.random.split(key, 3)
    x = jax.random.normal(kx, (N, Cin, H, W), dtype=jnp.float32)
    # ConvTranspose2d weight shape: (in_channels, out_channels, kH, kW); bias: (out_channels,)
    weight = 0.1 * jax.random.normal(kw, (Cin, Cout, 3, 3), dtype=jnp.float32)
    bias = 0.1 * jax.random.normal(kb, (Cout,), dtype=jnp.float32)

    fwd = jax.jit(transition_up, static_argnames=("ta",))
    ref = jax.block_until_ready(ref_transition_up(x, weight, bias))

    # Main run: auto tile size (single tile at this small H).
    out = jax.block_until_ready(fwd(x, weight, bias))
    assert out.shape == (N, Cout, 2 * H + 1, 2 * W + 1), out.shape
    assert jnp.allclose(out, ref, atol=1e-4, rtol=1e-4), float(jnp.max(jnp.abs(out - ref)))

    # Extra check: exercise the multi-tile (row-tiled) path + row-pair padding.
    out_tiled = jax.block_until_ready(fwd(x, weight, bias, ta=8))
    assert jnp.allclose(out_tiled, ref, atol=1e-4, rtol=1e-4), float(
        jnp.max(jnp.abs(out_tiled - ref)))

    print("KERNEL_OK")
</pallas_src>

<mosaic_0001>
module attributes {stable_mosaic.version = 11 : i64} {
  func.func @_convT_phase_kernel(%arg0: i32, %arg1: i32, %arg2: memref<1x1x4x307xf32, #tpu.memory_space<vmem>>, %arg3: memref<1x1x4x307xf32, #tpu.memory_space<vmem>>, %arg4: memref<4x32x4xf32, #tpu.memory_space<vmem>>, %arg5: memref<32x1xf32, #tpu.memory_space<vmem>>, %arg6: memref<1x1x32x306xf32, #tpu.memory_space<vmem>>) attributes {dimension_semantics = [#tpu.dimension_semantics<parallel>, #tpu.dimension_semantics<parallel>], iteration_bounds = array<i64: 2, 1>, scalar_prefetch = 0 : i64, scratch_operands = 0 : i64, tpu.core_type = #tpu.core_type<tc>, window_params = [{transform_indices = @transform_0, window_bounds = array<i64: 1, 1, 4, 307>}, {transform_indices = @transform_1, window_bounds = array<i64: 1, 1, 4, 307>}, {pipeline_mode = #tpu.pipeline_mode<synchronous>, transform_indices = @transform_2, window_bounds = array<i64: 4, 32, 4>}, {pipeline_mode = #tpu.pipeline_mode<synchronous>, transform_indices = @transform_3, window_bounds = array<i64: 32, 1>}, {transform_indices = @transform_4, window_bounds = array<i64: 1, 1, 32, 306>}]} {
    %c0 = arith.constant 0 : index
    %c0_0 = arith.constant 0 : index
    %c0_1 = arith.constant 0 : index
    %c0_2 = arith.constant 0 : index
    %0 = vector.load %arg2[%c0, %c0_0, %c0_1, %c0_2] : memref<1x1x4x307xf32, #tpu.memory_space<vmem>>, vector<1x1x4x307xf32>
    %1 = vector.shape_cast %0 : vector<1x1x4x307xf32> to vector<4x307xf32>
    %c0_3 = arith.constant 0 : index
    %c0_4 = arith.constant 0 : index
    %c0_5 = arith.constant 0 : index
    %c0_6 = arith.constant 0 : index
    %2 = vector.load %arg3[%c0_3, %c0_4, %c0_5, %c0_6] : memref<1x1x4x307xf32, #tpu.memory_space<vmem>>, vector<1x1x4x307xf32>
    %3 = vector.shape_cast %2 : vector<1x1x4x307xf32> to vector<4x307xf32>
    %4 = vector.extract_strided_slice %1 {offsets = [0, 0], sizes = [4, 306], strides = [1, 1]} : vector<4x307xf32> to vector<4x306xf32>
    %5 = vector.extract_strided_slice %1 {offsets = [0, 1], sizes = [4, 306], strides = [1, 1]} : vector<4x307xf32> to vector<4x306xf32>
    %6 = vector.extract_strided_slice %3 {offsets = [0, 0], sizes = [4, 306], strides = [1, 1]} : vector<4x307xf32> to vector<4x306xf32>
    %7 = vector.extract_strided_slice %3 {offsets = [0, 1], sizes = [4, 306], strides = [1, 1]} : vector<4x307xf32> to vector<4x306xf32>
    %c0_7 = arith.constant 0 : index
    %c0_8 = arith.constant 0 : index
    %c0_9 = arith.constant 0 : index
    %8 = vector.load %arg4[%c0_7, %c0_8, %c0_9] : memref<4x32x4xf32, #tpu.memory_space<vmem>>, vector<1x32x4xf32>
    %9 = vector.shape_cast %8 : vector<1x32x4xf32> to vector<32x4xf32>
    %cst = arith.constant dense<0.000000e+00> : vector<32x306xf32>
    %10 = tpu.matmul %9, %4, %cst {dimension_numbers = #tpu.dot_dimension_numbers<[1], [0], [0], [1], [0, 0, 1, 1], [], []>} : vector<32x4xf32>, vector<4x306xf32>, vector<32x306xf32> -> vector<32x306xf32>
    %c0_10 = arith.constant 0 : index
    %c0_11 = arith.constant 0 : index
    %11 = vector.load %arg5[%c0_10, %c0_11] : memref<32x1xf32, #tpu.memory_space<vmem>>, vector<32x1xf32>
    %12 = vector.broadcast %11 : vector<32x1xf32> to vector<32x306xf32>
    %13 = arith.addf %10, %12 : vector<32x306xf32>
    %c0_12 = arith.constant 0 : index
    %c0_13 = arith.constant 0 : index
    %c0_14 = arith.constant 0 : index
    %c0_15 = arith.constant 0 : index
    %14 = vector.load %arg6[%c0_12, %c0_13, %c0_14, %c0_15] : memref<1x1x32x306xf32, #tpu.memory_space<vmem>>, vector<1x1x32x306xf32>
    %15 = vector.shape_cast %14 : vector<1x1x32x306xf32> to vector<32x306xf32>
    %16 = vector.shape_cast %13 : vector<32x306xf32> to vector<1x1x32x306xf32>
    tpu.vector_store %arg6[%c0_12, %c0_13, %c0_14, %c0_15], %16 {strides = array<i32>} : memref<1x1x32x306xf32, #tpu.memory_space<vmem>>, vector<1x1x32x306xf32>,
    %c0_16 = arith.constant 0 : index
    %c0_17 = arith.constant 0 : index
    %c0_18 = arith.constant 0 : index
    %c0_19 = arith.constant 0 : index
    %17 = vector.load %arg6[%c0_16, %c0_17, %c0_18, %c0_19] : memref<1x1x32x306xf32, #tpu.memory_space<vmem>>, vector<1x1x32x306xf32>
    %18 = vector.shape_cast %17 : vector<1x1x32x306xf32> to vector<32x306xf32>
    %c1 = arith.constant 1 : index
    %c0_20 = arith.constant 0 : index
    %c0_21 = arith.constant 0 : index
    %19 = vector.load %arg4[%c1, %c0_20, %c0_21] : memref<4x32x4xf32, #tpu.memory_space<vmem>>, vector<1x32x4xf32>
    %20 = vector.shape_cast %19 : vector<1x32x4xf32> to vector<32x4xf32>
    %cst_22 = arith.constant dense<0.000000e+00> : vector<32x306xf32>
    %21 = tpu.matmul %20, %5, %cst_22 {dimension_numbers = #tpu.dot_dimension_numbers<[1], [0], [0], [1], [0, 0, 1, 1], [], []>} : vector<32x4xf32>, vector<4x306xf32>, vector<32x306xf32> -> vector<32x306xf32>
    %22 = arith.addf %18, %21 : vector<32x306xf32>
    %c0_23 = arith.constant 0 : index
    %c0_24 = arith.constant 0 : index
    %c0_25 = arith.constant 0 : index
    %c0_26 = arith.constant 0 : index
    %23 = vector.load %arg6[%c0_23, %c0_24, %c0_25, %c0_26] : memref<1x1x32x306xf32, #tpu.memory_space<vmem>>, vector<1x1x32x306xf32>
    %24 = vector.shape_cast %23 : vector<1x1x32x306xf32> to vector<32x306xf32>
    %25 = vector.shape_cast %22 : vector<32x306xf32> to vector<1x1x32x306xf32>
    tpu.vector_store %arg6[%c0_23, %c0_24, %c0_25, %c0_26], %25 {strides = array<i32>} : memref<1x1x32x306xf32, #tpu.memory_space<vmem>>, vector<1x1x32x306xf32>,
    %c0_27 = arith.constant 0 : index
    %c0_28 = arith.constant 0 : index
    %c0_29 = arith.constant 0 : index
    %c0_30 = arith.constant 0 : index
    %26 = vector.load %arg6[%c0_27, %c0_28, %c0_29, %c0_30] : memref<1x1x32x306xf32, #tpu.memory_space<vmem>>, vector<1x1x32x306xf32>
    %27 = vector.shape_cast %26 : vector<1x1x32x306xf32> to vector<32x306xf32>
    %c2 = arith.constant 2 : index
    %c0_31 = arith.constant 0 : index
    %c0_32 = arith.constant 0 : index
    %28 = vector.load %arg4[%c2, %c0_31, %c0_32] : memref<4x32x4xf32, #tpu.memory_space<vmem>>, vector<1x32x4xf32>
    %29 = vector.shape_cast %28 : vector<1x32x4xf32> to vector<32x4xf32>
    %cst_33 = arith.constant dense<0.000000e+00> : vector<32x306xf32>
    %30 = tpu.matmul %29, %6, %cst_33 {dimension_numbers = #tpu.dot_dimension_numbers<[1], [0], [0], [1], [0, 0, 1, 1], [], []>} : vector<32x4xf32>, vector<4x306xf32>, vector<32x306xf32> -> vector<32x306xf32>
    %31 = arith.addf %27, %30 : vector<32x306xf32>
    %c0_34 = arith.constant 0 : index
    %c0_35 = arith.constant 0 : index
    %c0_36 = arith.constant 0 : index
    %c0_37 = arith.constant 0 : index
    %32 = vector.load %arg6[%c0_34, %c0_35, %c0_36, %c0_37] : memref<1x1x32x306xf32, #tpu.memory_space<vmem>>, vector<1x1x32x306xf32>
    %33 = vector.shape_cast %32 : vector<1x1x32x306xf32> to vector<32x306xf32>
    %34 = vector.shape_cast %31 : vector<32x306xf32> to vector<1x1x32x306xf32>
    tpu.vector_store %arg6[%c0_34, %c0_35, %c0_36, %c0_37], %34 {strides = array<i32>} : memref<1x1x32x306xf32, #tpu.memory_space<vmem>>, vector<1x1x32x306xf32>,
    %c0_38 = arith.constant 0 : index
    %c0_39 = arith.constant 0 : index
    %c0_40 = arith.constant 0 : index
    %c0_41 = arith.constant 0 : index
    %35 = vector.load %arg6[%c0_38, %c0_39, %c0_40, %c0_41] : memref<1x1x32x306xf32, #tpu.memory_space<vmem>>, vector<1x1x32x306xf32>
    %36 = vector.shape_cast %35 : vector<1x1x32x306xf32> to vector<32x306xf32>
    %c3 = arith.constant 3 : index
    %c0_42 = arith.constant 0 : index
    %c0_43 = arith.constant 0 : index
    %37 = vector.load %arg4[%c3, %c0_42, %c0_43] : memref<4x32x4xf32, #tpu.memory_space<vmem>>, vector<1x32x4xf32>
    %38 = vector.shape_cast %37 : vector<1x32x4xf32> to vector<32x4xf32>
    %cst_44 = arith.constant dense<0.000000e+00> : vector<32x306xf32>
    %39 = tpu.matmul %38, %7, %cst_44 {dimension_numbers = #tpu.dot_dimension_numbers<[1], [0], [0], [1], [0, 0, 1, 1], [], []>} : vector<32x4xf32>, vector<4x306xf32>, vector<32x306xf32> -> vector<32x306xf32>
    %40 = arith.addf %36, %39 : vector<32x306xf32>
    %c0_45 = arith.constant 0 : index
    %c0_46 = arith.constant 0 : index
    %c0_47 = arith.constant 0 : index
    %c0_48 = arith.constant 0 : index
    %41 = vector.load %arg6[%c0_45, %c0_46, %c0_47, %c0_48] : memref<1x1x32x306xf32, #tpu.memory_space<vmem>>, vector<1x1x32x306xf32>
    %42 = vector.shape_cast %41 : vector<1x1x32x306xf32> to vector<32x306xf32>
    %43 = vector.shape_cast %40 : vector<32x306xf32> to vector<1x1x32x306xf32>
    tpu.vector_store %arg6[%c0_45, %c0_46, %c0_47, %c0_48], %43 {strides = array<i32>} : memref<1x1x32x306xf32, #tpu.memory_space<vmem>>, vector<1x1x32x306xf32>,
    return
  }
  func.func @transform_0(%arg0: i32, %arg1: i32) -> (i32, i32, i32, i32) {
    %c0_i32 = arith.constant 0 : i32
    %c0_i32_0 = arith.constant 0 : i32
    %c0_i32_1 = arith.constant 0 : i32
    return %arg0, %arg1, %c0_i32, %c0_i32_0 : i32, i32, i32, i32
  }
  func.func @transform_1(%arg0: i32, %arg1: i32) -> (i32, i32, i32, i32) {
    %c0_i32 = arith.constant 0 : i32
    %c0_i32_0 = arith.constant 0 : i32
    %c0_i32_1 = arith.constant 0 : i32
    return %arg0, %arg1, %c0_i32, %c0_i32_0 : i32, i32, i32, i32
  }
  func.func @transform_2(%arg0: i32, %arg1: i32) -> (i32, i32, i32) {
    %c0_i32 = arith.constant 0 : i32
    %c0_i32_0 = arith.constant 0 : i32
    %c0_i32_1 = arith.constant 0 : i32
    %c0_i32_2 = arith.constant 0 : i32
    return %c0_i32, %c0_i32_0, %c0_i32_1 : i32, i32, i32
  }
  func.func @transform_3(%arg0: i32, %arg1: i32) -> (i32, i32) {
    %c0_i32 = arith.constant 0 : i32
    %c0_i32_0 = arith.constant 0 : i32
    %c0_i32_1 = arith.constant 0 : i32
    return %c0_i32, %c0_i32_0 : i32, i32
  }
  func.func @transform_4(%arg0: i32, %arg1: i32) -> (i32, i32, i32, i32) {
    %c0_i32 = arith.constant 0 : i32
    %c0_i32_0 = arith.constant 0 : i32
    %c0_i32_1 = arith.constant 0 : i32
    return %arg0, %arg1, %c0_i32, %c0_i32_0 : i32, i32, i32, i32
  }
}

</mosaic_0001>

<llo_original>
// kernel: tile.0
$region0: #{tile.0}
  %s0 = inlined_call_operand.vmem [shape: f32[4,8], index: 0, kind: input, shape index: {}]
  %s1 = inlined_call_operand.vmem [shape: f32[32,1], index: 1, kind: output, shape index: {}]
  $region1: #{tile.0} parent=0
    #allocation0 [shape = 'u8[4096]{0}', space=vmem, size = 0x1000, scoped, tag = 'scoped mem for input reshape']
    %s3 = ssub.s32 16, 1
    %v4 = vld [vmem:[%s0] sm:%s3]
    %5 = vst [vmem:[#allocation0] sm:%s3] %v4
    %v6 = vld [vmem:[#allocation0] sm:$0xf]
    %vm7 = vcmask 7168
    %8 = vst.msk [vmem:[%s1] ss:$8 sm:$0xf] %vm7, %v6
    %v9 = vld [vmem:[#allocation0] sm:$0xf]
    %10 = vrot.lane.b32.xlu0 %v9, 127
    %v11 = vpop.permute.xlu0 %10
    %vm12 = vcmask 7168
    %s13 = scalar_lea.vmem %s1, 1
    %14 = vst.msk [vmem:[%s13] ss:$8 sm:$0xf] %vm12, %v11
    %v15 = vld [vmem:[#allocation0] sm:$0xf]
    %16 = vrot.lane.b32.xlu0 %v15, 126
    %v17 = vpop.permute.xlu0 %16
    %vm18 = vcmask 7168
    %s19 = scalar_lea.vmem %s1, 2
    %20 = vst.msk [vmem:[%s19] ss:$8 sm:$0xf] %vm18, %v17
    %v21 = vld [vmem:[#allocation0] sm:$0xf]
    %22 = vrot.lane.b32.xlu0 %v21, 125
    %v23 = vpop.permute.xlu0 %22
    %vm24 = vcmask 7168
    %s25 = scalar_lea.vmem %s1, 3
    %26 = vst.msk [vmem:[%s25] ss:$8 sm:$0xf] %vm24, %v23
    %v27 = vld [vmem:[#allocation0] sm:$0xf]
    %28 = vrot.lane.b32.xlu0 %v27, 124
    %v29 = vpop.permute.xlu0 %28
    %vm30 = vcmask 7168
    %s31 = scalar_lea.vmem %s1, 4
    %32 = vst.msk [vmem:[%s31] ss:$8 sm:$0xf] %vm30, %v29
    %v33 = vld [vmem:[#allocation0] sm:$0xf]
    %34 = vrot.lane.b32.xlu0 %v33, 123
    %v35 = vpop.permute.xlu0 %34
    %vm36 = vcmask 7168
    %s37 = scalar_lea.vmem %s1, 5
    %38 = vst.msk [vmem:[%s37] ss:$8 sm:$0xf] %vm36, %v35
    %v39 = vld [vmem:[#allocation0] sm:$0xf]
    %40 = vrot.lane.b32.xlu0 %v39, 122
    %v41 = vpop.permute.xlu0 %40
    %vm42 = vcmask 7168
    %s43 = scalar_lea.vmem %s1, 6
    %44 = vst.msk [vmem:[%s43] ss:$8 sm:$0xf] %vm42, %v41
    %v45 = vld [vmem:[#allocation0] sm:$0xf]
    %46 = vrot.lane.b32.xlu0 %v45, 121
    %v47 = vpop.permute.xlu0 %46
    %vm48 = vcmask 7168
    %s49 = scalar_lea.vmem %s1, 7
    %50 = vst.msk [vmem:[%s49] ss:$8 sm:$0xf] %vm48, %v47

// kernel: tile.8
$region0: #{tile.8}
  #allocation2 [shape = 's32[1]{0}', space=sflag, size = 0x4, scoped, tag = 'scoped memory for tile.8']
  %s0 = inlined_call_operand.hbm [shape: f32[8], index: 0, kind: input, shape index: {}]
  %s1 = inlined_call_operand.vmem [shape: f32[4,8], index: 1, kind: output, shape index: {}]
  $region1: #{tile.8} parent=0
    #allocation0 [shape = 'u8[512]{0}', space=vmem, size = 0x400, scoped, tag = 'operand span for operand 0']
    #allocation1 [shape = 's32[1]{0}', space=sflag, size = 0x4, scoped, tag = 'scoped memory for tile.8']
    %2 = vsyncpa [#allocation1], 0
    // Predicated region
    $region2: #{tile.8} parent=1 // pred_check
      _
    $region3: #{tile.8} parent=1 // pred_check_branch
      %4 = sbr.rel (0) target = $region5
    $region4: #{tile.8} parent=1 // pred_region
      %6 = vsyncadd [#allocation1], 0
      %s8 = sshll.u32 %s0, 4
      %s9 = int_to_ptr.hbm [resolvable:$true] %s8
      %s10 = sshll.u32 [#allocation0], 4
      %s11 = int_to_ptr.vmem [resolvable:$true] %s10
      %13 = dma.hbm_to_vmem [thread:$0]  %s9, 16, %s11, [#allocation1]
    $region5: #{tile.8} parent=1 // pred_fallthru
      _
    // Predicated region
    $region6: #{tile.8} parent=1 // pred_check
      _
    $region7: #{tile.8} parent=1 // pred_check_branch
      %15 = sbr.rel (0) target = $region9
    $region8: #{tile.8} parent=1 // pred_region
      %17 = dma.done [#allocation1], 16
    $region9: #{tile.8} parent=1 // pred_fallthru
      _
    %v18 = vld [vmem:[#allocation0] ss:$0 sm:$0xff]
    %19 = vst [vmem:[%s1] sm:$0xf] %v18
    %20 = vsyncpa [#allocation1], 1

// kernel: transition_up.1
$region0: #{transition_up.1}
  #allocation0 [shape = 'u32[]', space=smem, size = 0x4, offset = 0x4, fixed_abs, tag = 'smem constant byte address 0x4 - core index']
  #allocation1 [shape = 'u32[72,128]{1,0:T(1,128)}', space=vmem, size = 0x9000, scoped, tag = 'internal scratch']
  %s0 = inlined_call_operand.vmem [shape: f32[2,1,4,307], index: 0, kind: input, shape index: {}]
  %s1 = inlined_call_operand.vmem [shape: f32[2,1,4,307], index: 1, kind: input, shape index: {}]
  %s2 = inlined_call_operand.vmem [shape: f32[4,32,4], index: 2, kind: input, shape index: {}]
  %s3 = inlined_call_operand.vmem [shape: f32[32,1], index: 3, kind: input, shape index: {}]
  %s4 = inlined_call_operand.vmem [shape: f32[2,1,32,306], index: 4, kind: output, shape index: {}]
  %s5 = sld [smem:[#allocation0]]
  $region49: #{transition_up.1} parent=0
    _
  %s7 = ssub.s32 1, %s5
  %s8 = scalar_select 0, %s7, %s5
  loop: start=0, step=1, limit=4
  $region2: #{transition_up.1} parent=0 // loop_pre_header
    _
  $region3: #{transition_up.1} parent=0 // loop_header
    %s10 = sphi 0, %s14
    %p11 = scmp.ge.s32.totalorder %s10, 4
    %s17 = sphi 0, %s29
    %s18 = sphi 0, %s25
    %s19 = sphi 0, %s17
    %s20 = sphi 0, %s18
    %s21 = sphi 0, %s19
    %s22 = sphi 0, %s20
    %s34 = sphi 0, %s36
    %s37 = sphi 0, %s34
    %s38 = sphi 0, %s37
    %s54 = sphi 0, %s38
    %s62 = sphi 0, %s64
    %s65 = sphi 0, %s62
    %s66 = sphi 0, %s65
    %s82 = sphi 0, %s66
    %s86 = sphi 0, %s86
    %s88 = sphi 0, %s86
    %s89 = sphi 0, %s88
    %s103 = sphi 0, %s89
    %s107 = sphi 0, %s107
    %s109 = sphi 0, %s107
    %s110 = sphi 0, %s109
    %s124 = sphi 0, %s110
    %s132 = sphi 0, %s134
    %s135 = sphi 0, %s132
    %s136 = sphi 0, %s135
    %s152 = sphi 0, %s136
  $region4: #{transition_up.1} parent=0 // loop_header_branch
    %13 = sbr.rel (%p11) target = $region8
  $region5: #{transition_up.1} parent=0 // loop_body
    %s15 = ssub.s32 %s10, 1
    %s16 = ssub.s32 %s10, 2
    %s23 = sadd.s32 1, %s18
    %p24 = scmp.ge.s32.totalorder %s23, 1
    %s25 = scalar_select %p24, 0, %s23
    %s26 = sadd.s32 1, %s17
    %s27 = scalar_select %p24, %s26, %s17
    %p28 = scmp.ge.s32.totalorder %s27, 2
    %s29 = scalar_select %p28, 0, %s27
    %s30 = ssub.s32 %s17, %s29
    %s31 = ssub.s32 %s18, %s25
    %s32 = sor.u32 %s30, %s31
    %p33 = scmp.eq.s32.totalorder %s32, 0
    %s35 = sadd.s32 %s34, 1
    %s36 = scalar_select %p33, %s34, %s35
    %p39 = pneg %p33
    %p40 = scmp.eq.s32.totalorder %s10, 1
    %p41 = por %p39, %p40
    %p42 = scmp.ne.s32.totalorder %s34, %s37
    %p43 = scmp.eq.s32.totalorder %s10, 0
    %p44 = por %p42, %p43
    %p45 = scmp.ne.s32.totalorder %s34, %s37
    %p46 = scmp.eq.s32.totalorder %s15, 1
    %p47 = por %p45, %p46
    %p48 = scmp.ne.s32.totalorder %s37, %s38
    %p49 = scmp.eq.s32.totalorder %s15, 0
    %p50 = por %p48, %p49
    %p51 = scmp.ne.s32.totalorder %s37, %s38
    %p52 = scmp.eq.s32.totalorder %s16, 1
    %p53 = por %p51, %p52
    %p55 = scmp.ne.s32.totalorder %s38, %s54
    %p56 = scmp.eq.s32.totalorder %s16, 0
    %p57 = por %p55, %p56
    %s58 = ssub.s32 %s17, %s29
    %s59 = ssub.s32 %s18, %s25
    %s60 = sor.u32 %s58, %s59
    %p61 = scmp.eq.s32.totalorder %s60, 0
    %s63 = sadd.s32 %s62, 1
    %s64 = scalar_select %p61, %s62, %s63
    %p67 = pneg %p61
    %p68 = scmp.eq.s32.totalorder %s10, 1
    %p69 = por %p67, %p68
    %p70 = scmp.ne.s32.totalorder %s62, %s65
    %p71 = scmp.eq.s32.totalorder %s10, 0
    %p72 = por %p70, %p71
    %p73 = scmp.ne.s32.totalorder %s62, %s65
    %p74 = scmp.eq.s32.totalorder %s15, 1
    %p75 = por %p73, %p74
    %p76 = scmp.ne.s32.totalorder %s65, %s66
    %p77 = scmp.eq.s32.totalorder %s15, 0
    %p78 = por %p76, %p77
    %p79 = scmp.ne.s32.totalorder %s65, %s66
    %p80 = scmp.eq.s32.totalorder %s16, 1
    %p81 = por %p79, %p80
    %p83 = scmp.ne.s32.totalorder %s66, %s82
    %p84 = scmp.eq.s32.totalorder %s16, 0
    %p85 = por %p83, %p84
    %s87 = sadd.s32 %s86, 1
    %p90 = scmp.eq.s32.totalorder %s10, 1
    %p91 = scmp.ne.s32.totalorder %s86, %s88
    %p92 = scmp.eq.s32.totalorder %s10, 0
    %p93 = por %p91, %p92
    %p94 = scmp.ne.s32.totalorder %s86, %s88
    %p95 = scmp.eq.s32.totalorder %s15, 1
    %p96 = por %p94, %p95
    %p97 = scmp.ne.s32.totalorder %s88, %s89
    %p98 = scmp.eq.s32.totalorder %s15, 0
    %p99 = por %p97, %p98
    %p100 = scmp.ne.s32.totalorder %s88, %s89
    %p101 = scmp.eq.s32.totalorder %s16, 1
    %p102 = por %p100, %p101
    %p104 = scmp.ne.s32.totalorder %s89, %s103
    %p105 = scmp.eq.s32.totalorder %s16, 0
    %p106 = por %p104, %p105
    %s108 = sadd.s32 %s107, 1
    %p111 = scmp.eq.s32.totalorder %s10, 1
    %p112 = scmp.ne.s32.totalorder %s107, %s109
    %p113 = scmp.eq.s32.totalorder %s10, 0
    %p114 = por %p112, %p113
    %p115 = scmp.ne.s32.totalorder %s107, %s109
    %p116 = scmp.eq.s32.totalorder %s15, 1
    %p117 = por %p115, %p116
    %p118 = scmp.ne.s32.totalorder %s109, %s110
    %p119 = scmp.eq.s32.totalorder %s15, 0
    %p120 = por %p118, %p119
    %p121 = scmp.ne.s32.totalorder %s109, %s110
    %p122 = scmp.eq.s32.totalorder %s16, 1
    %p123 = por %p121, %p122
    %p125 = scmp.ne.s32.totalorder %s110, %s124
    %p126 = scmp.eq.s32.totalorder %s16, 0
    %p127 = por %p125, %p126
    %s128 = ssub.s32 %s17, %s29
    %s129 = ssub.s32 %s18, %s25
    %s130 = sor.u32 %s128, %s129
    %p131 = scmp.eq.s32.totalorder %s130, 0
    %s133 = sadd.s32 %s132, 1
    %s134 = scalar_select %p131, %s132, %s133
    %p137 = pneg %p131
    %p138 = scmp.eq.s32.totalorder %s10, 1
    %p139 = por %p137, %p138
    %p140 = scmp.ne.s32.totalorder %s132, %s135
    %p141 = scmp.eq.s32.totalorder %s10, 0
    %p142 = por %p140, %p141
    %p143 = scmp.ne.s32.totalorder %s132, %s135
    %p144 = scmp.eq.s32.totalorder %s15, 1
    %p145 = por %p143, %p144
    %p146 = scmp.ne.s32.totalorder %s135, %s136
    %p147 = scmp.eq.s32.totalorder %s15, 0
    %p148 = por %p146, %p147
    %p149 = scmp.ne.s32.totalorder %s135, %s136
    %p150 = scmp.eq.s32.totalorder %s16, 1
    %p151 = por %p149, %p150
    %p153 = scmp.ne.s32.totalorder %s136, %s152
    %p154 = scmp.eq.s32.totalorder %s16, 0
    %p155 = por %p153, %p154
    %p156 = scmp.le.s32.totalorder 1, %s10
    %p157 = scmp.lt.s32.totalorder %s10, 3
    %p158 = pnand %p156, %p157
    %p159 = pneg %p158
    // Predicated region
    $region9: #{transition_up.1} parent=5 // pred_check
      _
    $region10: #{transition_up.1} parent=5 // pred_check_branch
      %161 = sbr.rel (%p158) target = $region12
    $region11: #{transition_up.1} parent=5 // pred_region
      %s162 = ssub.s32 %s10, 1
      // Predicated region
      $region13: #{transition_up.1} parent=11 // pred_check
        %p163 = pneg %p99
      $region14: #{transition_up.1} parent=11 // pred_check_branch
        %165 = sbr.rel (%p163) target = $region16
      $region15: #{transition_up.1} parent=11 // pred_region
        _
      $region16: #{transition_up.1} parent=11 // pred_fallthru
        _
      // Predicated region
      $region17: #{transition_up.1} parent=11 // pred_check
        %p166 = pneg %p120
      $region18: #{transition_up.1} parent=11 // pred_check_branch
        %168 = sbr.rel (%p166) target = $region20
      $region19: #{transition_up.1} parent=11 // pred_region
        _
      $region20: #{transition_up.1} parent=11 // pred_fallthru
        _
    $region12: #{transition_up.1} parent=5 // pred_fallthru
      _
    %p169 = scmp.lt.s32.totalorder %s10, 2
    // Predicated region
    $region21: #{transition_up.1} parent=5 // pred_check
      %p170 = pneg %p169
    $region22: #{transition_up.1} parent=5 // pred_check_branch
      %172 = sbr.rel (%p170) target = $region24
    $region23: #{transition_up.1} parent=5 // pred_region
      // Predicated region
      $region25: #{transition_up.1} parent=23 // pred_check
        %p173 = pneg %p44
      $region26: #{transition_up.1} parent=23 // pred_check_branch
        %175 = sbr.rel (%p173) target = $region28
      $region27: #{transition_up.1} parent=23 // pred_region
        %p176 = scmp.lt.s32.totalorder %s17, 1
        %s177 = scalar_select %p176, %s17, 1
        %p178 = scmp.lt.s32.totalorder %s18, 0
        %s179 = scalar_select %p178, %s18, 0
        %s180 = smul.addr %s179, 3
        %s181 = smul.addr %s177, 3
        %s182 = sadd.s32 %s180, %s181
        %s183 = smul.addr %s182, 4
        %s184 = scalar_lea.vmem %s0, %s183
      $region28: #{transition_up.1} parent=23 // pred_fallthru
        _
      // Predicated region
      $region29: #{transition_up.1} parent=23 // pred_check
        %p185 = pneg %p72
      $region30: #{transition_up.1} parent=23 // pred_check_branch
        %187 = sbr.rel (%p185) target = $region32
      $region31: #{transition_up.1} parent=23 // pred_region
        %p188 = scmp.lt.s32.totalorder %s17, 1
        %s189 = scalar_select %p188, %s17, 1
        %p190 = scmp.lt.s32.totalorder %s18, 0
        %s191 = scalar_select %p190, %s18, 0
        %s192 = smul.addr %s191, 3
        %s193 = smul.addr %s189, 3
        %s194 = sadd.s32 %s192, %s193
        %s195 = smul.addr %s194, 4
        %s196 = scalar_lea.vmem %s1, %s195
      $region32: #{transition_up.1} parent=23 // pred_fallthru
        _
    $region24: #{transition_up.1} parent=5 // pred_fallthru
      _
    %p197 = scmp.le.s32.totalorder 1, %s10
    %p198 = scmp.lt.s32.totalorder %s10, 3
    %p199 = pnand %p197, %p198
    %p200 = pneg %p199
    // Predicated region
    $region33: #{transition_up.1} parent=5 // pred_check
      _
    $region34: #{transition_up.1} parent=5 // pred_check_branch
      %202 = sbr.rel (%p199) target = $region36
    $region35: #{transition_up.1} parent=5 // pred_region
      %s203 = ssub.s32 %s10, 1
      %p204 = scmp.lt.s32.totalorder %s19, 1
      %s205 = scalar_select %p204, %s19, 1
      %p206 = scmp.lt.s32.totalorder %s20, 0
      %s207 = scalar_select %p206, %s20, 0
      %s208 = smul.addr %s207, 3
      %s209 = smul.addr %s205, 3
      %s210 = sadd.s32 %s208, %s209
      %s211 = smul.addr %s210, 4
      %s212 = scalar_lea.vmem %s0, %s211
      %p213 = pneg %p50
      %p214 = pneg %p47
      %p215 = scmp.lt.s32.totalorder %s19, 1
      %s216 = scalar_select %p215, %s19, 1
      %p217 = scmp.lt.s32.totalorder %s20, 0
      %s218 = scalar_select %p217, %s20, 0
      %s219 = smul.addr %s218, 3
      %s220 = smul.addr %s216, 3
      %s221 = sadd.s32 %s219, %s220
      %s222 = smul.addr %s221, 4
      %s223 = scalar_lea.vmem %s1, %s222
      %p224 = pneg %p78
      %p225 = pneg %p75
      %p226 = pneg %p99
      %p227 = pneg %p96
      %p228 = pneg %p120
      %p229 = pneg %p117
      %p230 = pneg %p148
      %p231 = pneg %p145
      %p232 = scmp.lt.s32.totalorder %s19, 1
      %s233 = scalar_select %p232, %s19, 1
      %p234 = scmp.lt.s32.totalorder %s20, 0
      %s235 = scalar_select %p234, %s20, 0
      %s236 = smul.addr %s235, 12
      %s237 = smul.addr %s233, 12
      %s238 = sadd.s32 %s236, %s237
      %s239 = smul.addr %s238, 8
      %s240 = scalar_lea.vmem %s4, %s239
      %p241 = scmp.lt.s32.totalorder %s19, 1
      %s242 = scalar_select %p241, %s19, 1
      %p243 = scmp.lt.s32.totalorder %s20, 0
      %s244 = scalar_select %p243, %s20, 0
      %s245 = smul.addr %s244, 3
      %s246 = smul.addr %s242, 3
      %s247 = sadd.s32 %s245, %s246
      %s248 = smul.addr %s247, 4
      %s249 = scalar_lea.vmem %s0, %s248
      %p250 = scmp.lt.s32.totalorder %s19, 1
      %s251 = scalar_select %p250, %s19, 1
      %p252 = scmp.lt.s32.totalorder %s20, 0
      %s253 = scalar_select %p252, %s20, 0
      %s254 = smul.addr %s253, 3
      %s255 = smul.addr %s251, 3
      %s256 = sadd.s32 %s254, %s255
      %s257 = smul.addr %s256, 4
      %s258 = scalar_lea.vmem %s1, %s257
      %p259 = scmp.lt.s32.totalorder %s19, 1
      %s260 = scalar_select %p259, %s19, 1
      %p261 = scmp.lt.s32.totalorder %s20, 0
      %s262 = scalar_select %p261, %s20, 0
      %s263 = smul.addr %s262, 12
      %s264 = smul.addr %s260, 12
      %s265 = sadd.s32 %s263, %s264
      %s266 = smul.addr %s265, 8
      %s267 = scalar_lea.vmem %s4, %s266
      %v268 = vld [vmem:[%s249] sm:$0xff]
      %v269 = vld [vmem:[%s249 + $0x8] sm:$0xf]
      %v270 = vld [vmem:[%s258] sm:$0xff]
      %v271 = vld [vmem:[%s258 + $0x8] sm:$0xf]
      %v272 = vld [vmem:[%s2] sm:$0xff]
      %v273 = vld [vmem:[%s2 + $0x8] sm:$0xff]
      %v274 = vld [vmem:[%s2 + $0x10] sm:$0xff]
      %v275 = vld [vmem:[%s2 + $0x18] sm:$0xff]
      %v276 = vld [vmem:[%s3] sm:$0xff]
      %v277 = vld [vmem:[%s3 + $0x8] sm:$0xff]
      %v278 = vld [vmem:[%s3 + $0x10] sm:$0xff]
      %v279 = vld [vmem:[%s3 + $0x18] sm:$0xff]
      %281 = vset.pattern.permute.xlu0 0
      %282 = vperm.xlu0 %281, %v276
      %v283 = vpop.permute.xlu0 %282
      %286 = vset.pattern.permute.xlu0 0
      %287 = vperm.xlu0 %286, %v277
      %v288 = vpop.permute.xlu0 %287
      %291 = vset.pattern.permute.xlu0 0
      %292 = vperm.xlu0 %291, %v278
      %v293 = vpop.permute.xlu0 %292
      %296 = vset.pattern.permute.xlu0 0
      %297 = vperm.xlu0 %296, %v279
      %v298 = vpop.permute.xlu0 %297
      %302 = vst [vmem:[#allocation1] ss:$2 sm:$0xff] %v268
      %s303 = scalar_lea.vmem [#allocation1], 16
      %304 = vst [vmem:[%s303] ss:$2 sm:$0xff] %v269
      %v305 = vld.sshfl [vmem:[#allocation1] sm:$0xff pattern:$0x75316420]
      %v306 = vld.sshfl [vmem:[#allocation1 + $0x8] sm:$0xff pattern:$0x75316420]
      %v307 = vld.sshfl [vmem:[#allocation1 + $0x10] sm:$0xff pattern:$0x75316420]
      %vm308 = vcmask 31744
      %v310 = vsel %vm308, %v272, 0
      %v313 = vsel %vm308, %v273, 0
      %v316 = vsel %vm308, %v274, 0
      %v319 = vsel %vm308, %v275, 0
      %vm321 = vcmask 1043456
      %v322 = vsel %vm321, %v305, 0
      %v324 = vsel %vm321, %v306, 0
      %v326 = vsel %vm321, %v307, 0
      %328 = vmatpush.msra.mxu0 0.0
      %329 = vmatpush.msra.mxu0 0.0
      %330 = vmatpush.msra.mxu0 0.0
      %331 = vmatpush.msra.mxu0 0.0
      %332 = vmatpush.msra.mxu0 0.0
      %333 = vmatpush.msra.mxu0 0.0
      %334 = vmatpush.msra.mxu0 0.0
      %335 = vmatpush.msra.mxu0 0.0
      %336 = vmatpush.msra.mxu0 0.0
      %337 = vmatpush.msra.mxu0 0.0
      %338 = vmatpush.msra.mxu0 0.0
      %339 = vmatpush.msra.mxu0 0.0
      %340 = vmatpush.msra.mxu0 0.0
      %341 = vmatpush.msra.mxu0 0.0
      %342 = vmatpush.msra.mxu0 0.0
      %343 = vmatpush.msra.mxu0 %v322
      %344 = vmatmul.f32.gmra.mxu0 %v310
      %v345 = vpop.f32.mrf.mxu0
      %v346 = vadd.f32 %v283, %v345
      %347 = vmatmul.f32.gmra.mxu0 %v313
      %v348 = vpop.f32.mrf.mxu0
      %v349 = vadd.f32 %v288, %v348
      %350 = vmatmul.f32.gmra.mxu0 %v316
      %v351 = vpop.f32.mrf.mxu0
      %v352 = vadd.f32 %v293, %v351
      %353 = vmatmul.f32.gmra.mxu0 %v319
      %v354 = vpop.f32.mrf.mxu0
      %v355 = vadd.f32 %v298, %v354
      %356 = vdwg.mxu0
      %357 = vmatpush.msra.mxu0 0.0
      %358 = vmatpush.msra.mxu0 0.0
      %359 = vmatpush.msra.mxu0 0.0
      %360 = vmatpush.msra.mxu0 0.0
      %361 = vmatpush.msra.mxu0 0.0
      %362 = vmatpush.msra.mxu0 0.0
      %363 = vmatpush.msra.mxu0 0.0
      %364 = vmatpush.msra.mxu0 0.0
      %365 = vmatpush.msra.mxu0 0.0
      %366 = vmatpush.msra.mxu0 0.0
      %367 = vmatpush.msra.mxu0 0.0
      %368 = vmatpush.msra.mxu0 0.0
      %369 = vmatpush.msra.mxu0 0.0
      %370 = vmatpush.msra.mxu0 0.0
      %371 = vmatpush.msra.mxu0 0.0
      %372 = vmatpush.msra.mxu0 %v324
      %373 = vmatmul.f32.gmra.mxu0 %v310
      %v374 = vpop.f32.mrf.mxu0
      %v375 = vadd.f32 %v283, %v374
      %376 = vmatmul.f32.gmra.mxu0 %v313
      %v377 = vpop.f32.mrf.mxu0
      %v378 = vadd.f32 %v288, %v377
      %379 = vmatmul.f32.gmra.mxu0 %v316
      %v380 = vpop.f32.mrf.mxu0
      %v381 = vadd.f32 %v293, %v380
      %382 = vmatmul.f32.gmra.mxu0 %v319
      %v383 = vpop.f32.mrf.mxu0
      %v384 = vadd.f32 %v298, %v383
      %385 = vdwg.mxu0
      %386 = vmatpush.msra.mxu0 0.0
      %387 = vmatpush.msra.mxu0 0.0
      %388 = vmatpush.msra.mxu0 0.0
      %389 = vmatpush.msra.mxu0 0.0
      %390 = vmatpush.msra.mxu0 0.0
      %391 = vmatpush.msra.mxu0 0.0
      %392 = vmatpush.msra.mxu0 0.0
      %393 = vmatpush.msra.mxu0 0.0
      %394 = vmatpush.msra.mxu0 0.0
      %395 = vmatpush.msra.mxu0 0.0
      %396 = vmatpush.msra.mxu0 0.0
      %397 = vmatpush.msra.mxu0 0.0
      %398 = vmatpush.msra.mxu0 0.0
      %399 = vmatpush.msra.mxu0 0.0
      %400 = vmatpush.msra.mxu0 0.0
      %401 = vmatpush.msra.mxu0 %v326
      %402 = vmatmul.f32.gmra.mxu0 %v310
      %v403 = vpop.f32.mrf.mxu0
      %v404 = vadd.f32 %v283, %v403
      %405 = vmatmul.f32.gmra.mxu0 %v313
      %v406 = vpop.f32.mrf.mxu0
      %v407 = vadd.f32 %v288, %v406
      %408 = vmatmul.f32.gmra.mxu0 %v316
      %v409 = vpop.f32.mrf.mxu0
      %v410 = vadd.f32 %v293, %v409
      %411 = vmatmul.f32.gmra.mxu0 %v319
      %v412 = vpop.f32.mrf.mxu0
      %v413 = vadd.f32 %v298, %v412
      %414 = vdwg.mxu0
      %415 = vst [vmem:[%s267] sm:$0xff] %v346
      %416 = vst [vmem:[%s267 + $0x8] sm:$0xff] %v375
      %vm417 = vcmask 408576
      %418 = vst.msk [vmem:[%s267 + $0x10] sm:$0xff] %vm417, %v404
      %419 = vst [vmem:[%s267 + $0x18] sm:$0xff] %v349
      %420 = vst [vmem:[%s267 + $0x20] sm:$0xff] %v378
      %421 = vst.msk [vmem:[%s267 + $0x28] sm:$0xff] %vm417, %v407
      %422 = vst [vmem:[%s267 + $0x30] sm:$0xff] %v352
      %423 = vst [vmem:[%s267 + $0x38] sm:$0xff] %v381
      %424 = vst.msk [vmem:[%s267 + $0x40] sm:$0xff] %vm417, %v410
      %425 = vst [vmem:[%s267 + $0x48] sm:$0xff] %v355
      %426 = vst [vmem:[%s267 + $0x50] sm:$0xff] %v384
      %427 = vst.msk [vmem:[%s267 + $0x58] sm:$0xff] %vm417, %v413
      %v428 = vld [vmem:[%s267] sm:$0xff]
      %v429 = vld [vmem:[%s267 + $0x8] sm:$0xff]
      %v430 = vld [vmem:[%s267 + $0x10] sm:$0xff]
      %v431 = vld [vmem:[%s267 + $0x18] sm:$0xff]
      %v432 = vld [vmem:[%s267 + $0x20] sm:$0xff]
      %v433 = vld [vmem:[%s267 + $0x28] sm:$0xff]
      %v434 = vld [vmem:[%s267 + $0x30] sm:$0xff]
      %v435 = vld [vmem:[%s267 + $0x38] sm:$0xff]
      %v436 = vld [vmem:[%s267 + $0x40] sm:$0xff]
      %v437 = vld [vmem:[%s267 + $0x48] sm:$0xff]
      %v438 = vld [vmem:[%s267 + $0x50] sm:$0xff]
      %v439 = vld [vmem:[%s267 + $0x58] sm:$0xff]
      %s440 = scalar_lea.vmem %s2, 32
      %v441 = vld [vmem:[%s440] sm:$0xff]
      %v442 = vld [vmem:[%s440 + $0x8] sm:$0xff]
      %v443 = vld [vmem:[%s440 + $0x10] sm:$0xff]
      %v444 = vld [vmem:[%s440 + $0x18] sm:$0xff]
      %445 = vst [vmem:[#allocation1] ss:$2 sm:$0xff] %v268
      %s446 = scalar_lea.vmem [#allocation1], 16
      %447 = vst [vmem:[%s446] ss:$2 sm:$0xff] %v269
      %v448 = vld.sshfl [vmem:[#allocation1] sm:$0xff pattern:$0x75316420]
      %v449 = vld.sshfl [vmem:[#allocation1 + $0x8] sm:$0xff pattern:$0x75316420]
      %v450 = vld.sshfl [vmem:[#allocation1 + $0x10] sm:$0xff pattern:$0x75316420]
      %451 = vrot.lane.b32.xlu0 %v448, 127
      %v452 = vpop.permute.xlu0 %451
      %453 = vrot.lane.b32.xlu0 %v449, 127
      %v454 = vpop.permute.xlu0 %453
      %455 = vrot.lane.b32.xlu0 %v450, 127
      %v456 = vpop.permute.xlu0 %455
      %vm457 = vcmask 1039360
      %v458 = vsel %vm457, %v452, %v454
      %v459 = vsel %vm457, %v454, %v456
      %v461 = vsel %vm308, %v441, 0
      %v464 = vsel %vm308, %v442, 0
      %v467 = vsel %vm308, %v443, 0
      %v470 = vsel %vm308, %v444, 0
      %v472 = vsel %vm321, %v458, 0
      %v474 = vsel %vm321, %v459, 0
      %v476 = vsel %vm321, %v456, 0
      %478 = vmatpush.msra.mxu0 0.0
      %479 = vmatpush.msra.mxu0 0.0
      %480 = vmatpush.msra.mxu0 0.0
      %481 = vmatpush.msra.mxu0 0.0
      %482 = vmatpush.msra.mxu0 0.0
      %483 = vmatpush.msra.mxu0 0.0
      %484 = vmatpush.msra.mxu0 0.0
      %485 = vmatpush.msra.mxu0 0.0
      %486 = vmatpush.msra.mxu0 0.0
      %487 = vmatpush.msra.mxu0 0.0
      %488 = vmatpush.msra.mxu0 0.0
      %489 = vmatpush.msra.mxu0 0.0
      %490 = vmatpush.msra.mxu0 0.0
      %491 = vmatpush.msra.mxu0 0.0
      %492 = vmatpush.msra.mxu0 0.0
      %493 = vmatpush.msra.mxu0 %v472
      %494 = vmatmul.f32.gmra.mxu0 %v461
      %v495 = vpop.f32.mrf.mxu0
      %v496 = vadd.f32 0.0, %v495
      %497 = vmatmul.f32.gmra.mxu0 %v464
      %v498 = vpop.f32.mrf.mxu0
      %v499 = vadd.f32 0.0, %v498
      %500 = vmatmul.f32.gmra.mxu0 %v467
      %v501 = vpop.f32.mrf.mxu0
      %v502 = vadd.f32 0.0, %v501
      %503 = vmatmul.f32.gmra.mxu0 %v470
      %v504 = vpop.f32.mrf.mxu0
      %v505 = vadd.f32 0.0, %v504
      %506 = vdwg.mxu0
      %507 = vmatpush.msra.mxu0 0.0
      %508 = vmatpush.msra.mxu0 0.0
      %509 = vmatpush.msra.mxu0 0.0
      %510 = vmatpush.msra.mxu0 0.0
      %511 = vmatpush.msra.mxu0 0.0
      %512 = vmatpush.msra.mxu0 0.0
      %513 = vmatpush.msra.mxu0 0.0
      %514 = vmatpush.msra.mxu0 0.0
      %515 = vmatpush.msra.mxu0 0.0
      %516 = vmatpush.msra.mxu0 0.0
      %517 = vmatpush.msra.mxu0 0.0
      %518 = vmatpush.msra.mxu0 0.0
      %519 = vmatpush.msra.mxu0 0.0
      %520 = vmatpush.msra.mxu0 0.0
      %521 = vmatpush.msra.mxu0 0.0
      %522 = vmatpush.msra.mxu0 %v474
      %523 = vmatmul.f32.gmra.mxu0 %v461
      %v524 = vpop.f32.mrf.mxu0
      %v525 = vadd.f32 0.0, %v524
      %526 = vmatmul.f32.gmra.mxu0 %v464
      %v527 = vpop.f32.mrf.mxu0
      %v528 = vadd.f32 0.0, %v527
      %529 = vmatmul.f32.gmra.mxu0 %v467
      %v530 = vpop.f32.mrf.mxu0
      %v531 = vadd.f32 0.0, %v530
      %532 = vmatmul.f32.gmra.mxu0 %v470
      %v533 = vpop.f32.mrf.mxu0
      %v534 = vadd.f32 0.0, %v533
      %535 = vdwg.mxu0
      %536 = vmatpush.msra.mxu0 0.0
      %537 = vmatpush.msra.mxu0 0.0
      %538 = vmatpush.msra.mxu0 0.0
      %539 = vmatpush.msra.mxu0 0.0
      %540 = vmatpush.msra.mxu0 0.0
      %541 = vmatpush.msra.mxu0 0.0
      %542 = vmatpush.msra.mxu0 0.0
      %543 = vmatpush.msra.mxu0 0.0
      %544 = vmatpush.msra.mxu0 0.0
      %545 = vmatpush.msra.mxu0 0.0
      %546 = vmatpush.msra.mxu0 0.0
      %547 = vmatpush.msra.mxu0 0.0
      %548 = vmatpush.msra.mxu0 0.0
      %549 = vmatpush.msra.mxu0 0.0
      %550 = vmatpush.msra.mxu0 0.0
      %551 = vmatpush.msra.mxu0 %v476
      %552 = vmatmul.f32.gmra.mxu0 %v461
      %v553 = vpop.f32.mrf.mxu0
      %v554 = vadd.f32 0.0, %v553
      %555 = vmatmul.f32.gmra.mxu0 %v464
      %v556 = vpop.f32.mrf.mxu0
      %v557 = vadd.f32 0.0, %v556
      %558 = vmatmul.f32.gmra.mxu0 %v467
      %v559 = vpop.f32.mrf.mxu0
      %v560 = vadd.f32 0.0, %v559
      %561 = vmatmul.f32.gmra.mxu0 %v470
      %v562 = vpop.f32.mrf.mxu0
      %v563 = vadd.f32 0.0, %v562
      %564 = vdwg.mxu0
      %v565 = vadd.f32 %v428, %v496
      %v566 = vadd.f32 %v429, %v525
      %v567 = vadd.f32 %v430, %v554
      %v568 = vadd.f32 %v431, %v499
      %v569 = vadd.f32 %v432, %v528
      %v570 = vadd.f32 %v433, %v557
      %v571 = vadd.f32 %v434, %v502
      %v572 = vadd.f32 %v435, %v531
      %v573 = vadd.f32 %v436, %v560
      %v574 = vadd.f32 %v437, %v505
      %v575 = vadd.f32 %v438, %v534
      %v576 = vadd.f32 %v439, %v563
      %577 = vst [vmem:[%s267] sm:$0xff] %v565
      %578 = vst [vmem:[%s267 + $0x8] sm:$0xff] %v566
      %579 = vst.msk [vmem:[%s267 + $0x10] sm:$0xff] %vm417, %v567
      %580 = vst [vmem:[%s267 + $0x18] sm:$0xff] %v568
      %581 = vst [vmem:[%s267 + $0x20] sm:$0xff] %v569
      %582 = vst.msk [vmem:[%s267 + $0x28] sm:$0xff] %vm417, %v570
      %583 = vst [vmem:[%s267 + $0x30] sm:$0xff] %v571
      %584 = vst [vmem:[%s267 + $0x38] sm:$0xff] %v572
      %585 = vst.msk [vmem:[%s267 + $0x40] sm:$0xff] %vm417, %v573
      %586 = vst [vmem:[%s267 + $0x48] sm:$0xff] %v574
      %587 = vst [vmem:[%s267 + $0x50] sm:$0xff] %v575
      %588 = vst.msk [vmem:[%s267 + $0x58] sm:$0xff] %vm417, %v576
      %v589 = vld [vmem:[%s267] sm:$0xff]
      %v590 = vld [vmem:[%s267 + $0x8] sm:$0xff]
      %v591 = vld [vmem:[%s267 + $0x10] sm:$0xff]
      %v592 = vld [vmem:[%s267 + $0x18] sm:$0xff]
      %v593 = vld [vmem:[%s267 + $0x20] sm:$0xff]
      %v594 = vld [vmem:[%s267 + $0x28] sm:$0xff]
      %v595 = vld [vmem:[%s267 + $0x30] sm:$0xff]
      %v596 = vld [vmem:[%s267 + $0x38] sm:$0xff]
      %v597 = vld [vmem:[%s267 + $0x40] sm:$0xff]
      %v598 = vld [vmem:[%s267 + $0x48] sm:$0xff]
      %v599 = vld [vmem:[%s267 + $0x50] sm:$0xff]
      %v600 = vld [vmem:[%s267 + $0x58] sm:$0xff]
      %s601 = scalar_lea.vmem %s2, 64
      %v602 = vld [vmem:[%s601] sm:$0xff]
      %v603 = vld [vmem:[%s601 + $0x8] sm:$0xff]
      %v604 = vld [vmem:[%s601 + $0x10] sm:$0xff]
      %v605 = vld [vmem:[%s601 + $0x18] sm:$0xff]
      %608 = vst [vmem:[#allocation1] ss:$2 sm:$0xff] %v270
      %s609 = scalar_lea.vmem [#allocation1], 16
      %610 = vst [vmem:[%s609] ss:$2 sm:$0xff] %v271
      %v611 = vld.sshfl [vmem:[#allocation1] sm:$0xff pattern:$0x75316420]
      %v612 = vld.sshfl [vmem:[#allocation1 + $0x8] sm:$0xff pattern:$0x75316420]
      %v613 = vld.sshfl [vmem:[#allocation1 + $0x10] sm:$0xff pattern:$0x75316420]
      %v615 = vsel %vm308, %v602, 0
      %v618 = vsel %vm308, %v603, 0
      %v621 = vsel %vm308, %v604, 0
      %v624 = vsel %vm308, %v605, 0
      %v626 = vsel %vm321, %v611, 0
      %v628 = vsel %vm321, %v612, 0
      %v630 = vsel %vm321, %v613, 0
      %632 = vmatpush.msra.mxu0 0.0
      %633 = vmatpush.msra.mxu0 0.0
      %634 = vmatpush.msra.mxu0 0.0
      %635 = vmatpush.msra.mxu0 0.0
      %636 = vmatpush.msra.mxu0 0.0
      %637 = vmatpush.msra.mxu0 0.0
      %638 = vmatpush.msra.mxu0 0.0
      %639 = vmatpush.msra.mxu0 0.0
      %640 = vmatpush.msra.mxu0 0.0
      %641 = vmatpush.msra.mxu0 0.0
      %642 = vmatpush.msra.mxu0 0.0
      %643 = vmatpush.msra.mxu0 0.0
      %644 = vmatpush.msra.mxu0 0.0
      %645 = vmatpush.msra.mxu0 0.0
      %646 = vmatpush.msra.mxu0 0.0
      %647 = vmatpush.msra.mxu0 %v626
      %648 = vmatmul.f32.gmra.mxu0 %v615
      %v649 = vpop.f32.mrf.mxu0
      %v650 = vadd.f32 0.0, %v649
      %651 = vmatmul.f32.gmra.mxu0 %v618
      %v652 = vpop.f32.mrf.mxu0
      %v653 = vadd.f32 0.0, %v652
      %654 = vmatmul.f32.gmra.mxu0 %v621
      %v655 = vpop.f32.mrf.mxu0
      %v656 = vadd.f32 0.0, %v655
      %657 = vmatmul.f32.gmra.mxu0 %v624
      %v658 = vpop.f32.mrf.mxu0
      %v659 = vadd.f32 0.0, %v658
      %660 = vdwg.mxu0
      %661 = vmatpush.msra.mxu0 0.0
      %662 = vmatpush.msra.mxu0 0.0
      %663 = vmatpush.msra.mxu0 0.0
      %664 = vmatpush.msra.mxu0 0.0
      %665 = vmatpush.msra.mxu0 0.0
      %666 = vmatpush.msra.mxu0 0.0
      %667 = vmatpush.msra.mxu0 0.0
      %668 = vmatpush.msra.mxu0 0.0
      %669 = vmatpush.msra.mxu0 0.0
      %670 = vmatpush.msra.mxu0 0.0
      %671 = vmatpush.msra.mxu0 0.0
      %672 = vmatpush.msra.mxu0 0.0
      %673 = vmatpush.msra.mxu0 0.0
      %674 = vmatpush.msra.mxu0 0.0
      %675 = vmatpush.msra.mxu0 0.0
      %676 = vmatpush.msra.mxu0 %v628
      %677 = vmatmul.f32.gmra.mxu0 %v615
      %v678 = vpop.f32.mrf.mxu0
      %v679 = vadd.f32 0.0, %v678
      %680 = vmatmul.f32.gmra.mxu0 %v618
      %v681 = vpop.f32.mrf.mxu0
      %v682 = vadd.f32 0.0, %v681
      %683 = vmatmul.f32.gmra.mxu0 %v621
      %v684 = vpop.f32.mrf.mxu0
      %v685 = vadd.f32 0.0, %v684
      %686 = vmatmul.f32.gmra.mxu0 %v624
      %v687 = vpop.f32.mrf.mxu0
      %v688 = vadd.f32 0.0, %v687
      %689 = vdwg.mxu0
      %690 = vmatpush.msra.mxu0 0.0
      %691 = vmatpush.msra.mxu0 0.0
      %692 = vmatpush.msra.mxu0 0.0
      %693 = vmatpush.msra.mxu0 0.0
      %694 = vmatpush.msra.mxu0 0.0
      %695 = vmatpush.msra.mxu0 0.0
      %696 = vmatpush.msra.mxu0 0.0
      %697 = vmatpush.msra.mxu0 0.0
      %698 = vmatpush.msra.mxu0 0.0
      %699 = vmatpush.msra.mxu0 0.0
      %700 = vmatpush.msra.mxu0 0.0
      %701 = vmatpush.msra.mxu0 0.0
      %702 = vmatpush.msra.mxu0 0.0
      %703 = vmatpush.msra.mxu0 0.0
      %704 = vmatpush.msra.mxu0 0.0
      %705 = vmatpush.msra.mxu0 %v630
      %706 = vmatmul.f32.gmra.mxu0 %v615
      %v707 = vpop.f32.mrf.mxu0
      %v708 = vadd.f32 0.0, %v707
      %709 = vmatmul.f32.gmra.mxu0 %v618
      %v710 = vpop.f32.mrf.mxu0
      %v711 = vadd.f32 0.0, %v710
      %712 = vmatmul.f32.gmra.mxu0 %v621
      %v713 = vpop.f32.mrf.mxu0
      %v714 = vadd.f32 0.0, %v713
      %715 = vmatmul.f32.gmra.mxu0 %v624
      %v716 = vpop.f32.mrf.mxu0
      %v717 = vadd.f32 0.0, %v716
      %718 = vdwg.mxu0
      %v719 = vadd.f32 %v589, %v650
      %v720 = vadd.f32 %v590, %v679
      %v721 = vadd.f32 %v591, %v708
      %v722 = vadd.f32 %v592, %v653
      %v723 = vadd.f32 %v593, %v682
      %v724 = vadd.f32 %v594, %v711
      %v725 = vadd.f32 %v595, %v656
      %v726 = vadd.f32 %v596, %v685
      %v727 = vadd.f32 %v597, %v714
      %v728 = vadd.f32 %v598, %v659
      %v729 = vadd.f32 %v599, %v688
      %v730 = vadd.f32 %v600, %v717
      %731 = vst [vmem:[%s267] sm:$0xff] %v719
      %732 = vst [vmem:[%s267 + $0x8] sm:$0xff] %v720
      %733 = vst.msk [vmem:[%s267 + $0x10] sm:$0xff] %vm417, %v721
      %734 = vst [vmem:[%s267 + $0x18] sm:$0xff] %v722
      %735 = vst [vmem:[%s267 + $0x20] sm:$0xff] %v723
      %736 = vst.msk [vmem:[%s267 + $0x28] sm:$0xff] %vm417, %v724
      %737 = vst [vmem:[%s267 + $0x30] sm:$0xff] %v725
      %738 = vst [vmem:[%s267 + $0x38] sm:$0xff] %v726
      %739 = vst.msk [vmem:[%s267 + $0x40] sm:$0xff] %vm417, %v727
      %740 = vst [vmem:[%s267 + $0x48] sm:$0xff] %v728
      %741 = vst [vmem:[%s267 + $0x50] sm:$0xff] %v729
      %742 = vst.msk [vmem:[%s267 + $0x58] sm:$0xff] %vm417, %v730
      %v743 = vld [vmem:[%s267] sm:$0xff]
      %v744 = vld [vmem:[%s267 + $0x8] sm:$0xff]
      %v745 = vld [vmem:[%s267 + $0x10] sm:$0xff]
      %v746 = vld [vmem:[%s267 + $0x18] sm:$0xff]
      %v747 = vld [vmem:[%s267 + $0x20] sm:$0xff]
      %v748 = vld [vmem:[%s267 + $0x28] sm:$0xff]
      %v749 = vld [vmem:[%s267 + $0x30] sm:$0xff]
      %v750 = vld [vmem:[%s267 + $0x38] sm:$0xff]
      %v751 = vld [vmem:[%s267 + $0x40] sm:$0xff]
      %v752 = vld [vmem:[%s267 + $0x48] sm:$0xff]
      %v753 = vld [vmem:[%s267 + $0x50] sm:$0xff]
      %v754 = vld [vmem:[%s267 + $0x58] sm:$0xff]
      %s755 = scalar_lea.vmem %s2, 96
      %v756 = vld [vmem:[%s755] sm:$0xff]
      %v757 = vld [vmem:[%s755 + $0x8] sm:$0xff]
      %v758 = vld [vmem:[%s755 + $0x10] sm:$0xff]
      %v759 = vld [vmem:[%s755 + $0x18] sm:$0xff]
      %760 = vst [vmem:[#allocation1] ss:$2 sm:$0xff] %v270
      %s761 = scalar_lea.vmem [#allocation1], 16
      %762 = vst [vmem:[%s761] ss:$2 sm:$0xff] %v271
      %v763 = vld.sshfl [vmem:[#allocation1] sm:$0xff pattern:$0x75316420]
      %v764 = vld.sshfl [vmem:[#allocation1 + $0x8] sm:$0xff pattern:$0x75316420]
      %v765 = vld.sshfl [vmem:[#allocation1 + $0x10] sm:$0xff pattern:$0x75316420]
      %766 = vrot.lane.b32.xlu0 %v763, 127
      %v767 = vpop.permute.xlu0 %766
      %768 = vrot.lane.b32.xlu0 %v764, 127
      %v769 = vpop.permute.xlu0 %768
      %770 = vrot.lane.b32.xlu0 %v765, 127
      %v771 = vpop.permute.xlu0 %770
      %v772 = vsel %vm457, %v767, %v769
      %v773 = vsel %vm457, %v769, %v771
      %v775 = vsel %vm308, %v756, 0
      %v778 = vsel %vm308, %v757, 0
      %v781 = vsel %vm308, %v758, 0
      %v784 = vsel %vm308, %v759, 0
      %v786 = vsel %vm321, %v772, 0
      %v788 = vsel %vm321, %v773, 0
      %v790 = vsel %vm321, %v771, 0
      %792 = vmatpush.msra.mxu0 0.0
      %793 = vmatpush.msra.mxu0 0.0
      %794 = vmatpush.msra.mxu0 0.0
      %795 = vmatpush.msra.mxu0 0.0
      %796 = vmatpush.msra.mxu0 0.0
      %797 = vmatpush.msra.mxu0 0.0
      %798 = vmatpush.msra.mxu0 0.0
      %799 = vmatpush.msra.mxu0 0.0
      %800 = vmatpush.msra.mxu0 0.0
      %801 = vmatpush.msra.mxu0 0.0
      %802 = vmatpush.msra.mxu0 0.0
      %803 = vmatpush.msra.mxu0 0.0
      %804 = vmatpush.msra.mxu0 0.0
      %805 = vmatpush.msra.mxu0 0.0
      %806 = vmatpush.msra.mxu0 0.0
      %807 = vmatpush.msra.mxu0 %v786
      %808 = vmatmul.f32.gmra.mxu0 %v775
      %v809 = vpop.f32.mrf.mxu0
      %v810 = vadd.f32 0.0, %v809
      %811 = vmatmul.f32.gmra.mxu0 %v778
      %v812 = vpop.f32.mrf.mxu0
      %v813 = vadd.f32 0.0, %v812
      %814 = vmatmul.f32.gmra.mxu0 %v781
      %v815 = vpop.f32.mrf.mxu0
      %v816 = vadd.f32 0.0, %v815
      %817 = vmatmul.f32.gmra.mxu0 %v784
      %v818 = vpop.f32.mrf.mxu0
      %v819 = vadd.f32 0.0, %v818
      %820 = vdwg.mxu0
      %821 = vmatpush.msra.mxu0 0.0
      %822 = vmatpush.msra.mxu0 0.0
      %823 = vmatpush.msra.mxu0 0.0
      %824 = vmatpush.msra.mxu0 0.0
      %825 = vmatpush.msra.mxu0 0.0
      %826 = vmatpush.msra.mxu0 0.0
      %827 = vmatpush.msra.mxu0 0.0
      %828 = vmatpush.msra.mxu0 0.0
      %829 = vmatpush.msra.mxu0 0.0
      %830 = vmatpush.msra.mxu0 0.0
      %831 = vmatpush.msra.mxu0 0.0
      %832 = vmatpush.msra.mxu0 0.0
      %833 = vmatpush.msra.mxu0 0.0
      %834 = vmatpush.msra.mxu0 0.0
      %835 = vmatpush.msra.mxu0 0.0
      %836 = vmatpush.msra.mxu0 %v788
      %837 = vmatmul.f32.gmra.mxu0 %v775
      %v838 = vpop.f32.mrf.mxu0
      %v839 = vadd.f32 0.0, %v838
      %840 = vmatmul.f32.gmra.mxu0 %v778
      %v841 = vpop.f32.mrf.mxu0
      %v842 = vadd.f32 0.0, %v841
      %843 = vmatmul.f32.gmra.mxu0 %v781
      %v844 = vpop.f32.mrf.mxu0
      %v845 = vadd.f32 0.0, %v844
      %846 = vmatmul.f32.gmra.mxu0 %v784
      %v847 = vpop.f32.mrf.mxu0
      %v848 = vadd.f32 0.0, %v847
      %849 = vdwg.mxu0
      %850 = vmatpush.msra.mxu0 0.0
      %851 = vmatpush.msra.mxu0 0.0
      %852 = vmatpush.msra.mxu0 0.0
      %853 = vmatpush.msra.mxu0 0.0
      %854 = vmatpush.msra.mxu0 0.0
      %855 = vmatpush.msra.mxu0 0.0
      %856 = vmatpush.msra.mxu0 0.0
      %857 = vmatpush.msra.mxu0 0.0
      %858 = vmatpush.msra.mxu0 0.0
      %859 = vmatpush.msra.mxu0 0.0
      %860 = vmatpush.msra.mxu0 0.0
      %861 = vmatpush.msra.mxu0 0.0
      %862 = vmatpush.msra.mxu0 0.0
      %863 = vmatpush.msra.mxu0 0.0
      %864 = vmatpush.msra.mxu0 0.0
      %865 = vmatpush.msra.mxu0 %v790
      %866 = vmatmul.f32.gmra.mxu0 %v775
      %v867 = vpop.f32.mrf.mxu0
      %v868 = vadd.f32 0.0, %v867
      %869 = vmatmul.f32.gmra.mxu0 %v778
      %v870 = vpop.f32.mrf.mxu0
      %v871 = vadd.f32 0.0, %v870
      %872 = vmatmul.f32.gmra.mxu0 %v781
      %v873 = vpop.f32.mrf.mxu0
      %v874 = vadd.f32 0.0, %v873
      %875 = vmatmul.f32.gmra.mxu0 %v784
      %v876 = vpop.f32.mrf.mxu0
      %v877 = vadd.f32 0.0, %v876
      %878 = vdwg.mxu0
      %v879 = vadd.f32 %v743, %v810
      %v880 = vadd.f32 %v744, %v839
      %v881 = vadd.f32 %v745, %v868
      %v882 = vadd.f32 %v746, %v813
      %v883 = vadd.f32 %v747, %v842
      %v884 = vadd.f32 %v748, %v871
      %v885 = vadd.f32 %v749, %v816
      %v886 = vadd.f32 %v750, %v845
      %v887 = vadd.f32 %v751, %v874
      %v888 = vadd.f32 %v752, %v819
      %v889 = vadd.f32 %v753, %v848
      %v890 = vadd.f32 %v754, %v877
      %891 = vst [vmem:[%s267] sm:$0xff] %v879
      %892 = vst [vmem:[%s267 + $0x8] sm:$0xff] %v880
      %893 = vst.msk [vmem:[%s267 + $0x10] sm:$0xff] %vm417, %v881
      %894 = vst [vmem:[%s267 + $0x18] sm:$0xff] %v882
      %895 = vst [vmem:[%s267 + $0x20] sm:$0xff] %v883
      %896 = vst.msk [vmem:[%s267 + $0x28] sm:$0xff] %vm417, %v884
      %897 = vst [vmem:[%s267 + $0x30] sm:$0xff] %v885
      %898 = vst [vmem:[%s267 + $0x38] sm:$0xff] %v886
      %899 = vst.msk [vmem:[%s267 + $0x40] sm:$0xff] %vm417, %v887
      %900 = vst [vmem:[%s267 + $0x48] sm:$0xff] %v888
      %901 = vst [vmem:[%s267 + $0x50] sm:$0xff] %v889
      %902 = vst.msk [vmem:[%s267 + $0x58] sm:$0xff] %vm417, %v890
      %p903 = scmp.lt.s32.totalorder %s19, 1
      %s904 = scalar_select %p903, %s19, 1
      %p905 = scmp.lt.s32.totalorder %s20, 0
      %s906 = scalar_select %p905, %s20, 0
      %s907 = smul.addr %s906, 12
      %s908 = smul.addr %s904, 12
      %s909 = sadd.s32 %s907, %s908
      %s910 = smul.addr %s909, 8
      %s911 = scalar_lea.vmem %s4, %s910
      // Predicated region
      $region37: #{transition_up.1} parent=35 // pred_check
        %p912 = pneg %p145
      $region38: #{transition_up.1} parent=35 // pred_check_branch
        %914 = sbr.rel (%p912) target = $region40
      $region39: #{transition_up.1} parent=35 // pred_region
        _
      $region40: #{transition_up.1} parent=35 // pred_fallthru
        _
    $region36: #{transition_up.1} parent=5 // pred_fallthru
      _
    %p915 = scmp.le.s32.totalorder 2, %s10
    // Predicated region
    $region41: #{transition_up.1} parent=5 // pred_check
      %p916 = pneg %p915
    $region42: #{transition_up.1} parent=5 // pred_check_branch
      %918 = sbr.rel (%p916) target = $region44
    $region43: #{transition_up.1} parent=5 // pred_region
      %s919 = ssub.s32 %s10, 2
      // Predicated region
      $region45: #{transition_up.1} parent=43 // pred_check
        %p920 = pneg %p151
      $region46: #{transition_up.1} parent=43 // pred_check_branch
        %922 = sbr.rel (%p920) target = $region48
      $region47: #{transition_up.1} parent=43 // pred_region
        %p923 = scmp.lt.s32.totalorder %s21, 1
        %s924 = scalar_select %p923, %s21, 1
        %p925 = scmp.lt.s32.totalorder %s22, 0
        %s926 = scalar_select %p925, %s22, 0
        %s927 = smul.addr %s926, 12
        %s928 = smul.addr %s924, 12
        %s929 = sadd.s32 %s927, %s928
        %s930 = smul.addr %s929, 8
        %s931 = scalar_lea.vmem %s4, %s930
      $region48: #{transition_up.1} parent=43 // pred_fallthru
        _
    $region44: #{transition_up.1} parent=5 // pred_fallthru
      _
  $region6: #{transition_up.1} parent=0 // loop_footer
    %s14 = sadd.s32 1, %s10
  $region7: #{transition_up.1} parent=0 // loop_footer_branch
    %9 = sbr.rel target = $region3
  $region8: #{transition_up.1} parent=0 // loop_exit
    _

</llo_original>
